<compile_context>
chip_gen: v5e
topology: v5e:2x2
jax: 0.10.0
libtpu: 0.0.40
codegen_flags: <defaults>
</compile_context>

<pallas_src>
import functools
import math

import jax
import jax.numpy as jnp
from jax.experimental import pallas as pl
from jax.experimental.pallas import tpu as pltpu


def combined_kernel(emb_ref, w_ref, inv_row_ref, inv_col_ref, label_ref,
                    out_ref, *, s, cos_m, sin_m, th, mm, m3, easy_margin):
    j = pl.program_id(0)

    emb = emb_ref[...]            # (B, D)   whole embedding block (tiny, resident)
    w = w_ref[...]                # (TN, D)  class tile in the original (C, D) layout

    # Raw matmul on the MXU (f32 accumulate), contracting D of both operands
    # (trans_b) so no wrapper-side transpose of the weight is needed.
    raw = jax.lax.dot_general(
        emb, w, dimension_numbers=(((1,), (1,)), ((), ())),
        preferred_element_type=jnp.float32)                              # (B, TN)

    # Normalize after the matmul with precomputed inverse norms.
    cosine = raw * inv_row_ref[...] * inv_col_ref[...]                   # (B, TN)

    # cos(theta + m2) - m3, with the "hard" fallback when cosine <= cos(pi-m2).
    sine = jnp.sqrt(jnp.maximum(1.0 - cosine * cosine, 0.0))
    phi = cosine * cos_m - sine * sin_m - m3
    if easy_margin:
        phi = jnp.where(cosine > 0.0, phi, cosine)
    else:
        phi = jnp.where(cosine > th, phi, cosine - mm)

    B, TN = cosine.shape
    class_ids = jax.lax.broadcasted_iota(jnp.int32, (B, TN), dimension=1) + j * TN
    onehot = class_ids == label_ref[...]                                 # (B,1) -> (B,TN)

    out_ref[...] = (jnp.where(onehot, phi, cosine) * s).astype(out_ref.dtype)


def combined_forward(embeddings, weight, labels, *,
                     s=64.0, m2=0.3, m3=0.2, easy_margin=False,
                     tn=512, out_dtype=jnp.float32):
    """embeddings: (B, D), weight: (C, D) PyTorch layout, labels: (B,) int.

    `weight` may be f32 or bf16; accumulation stays f32.  `tn` is the class
    tile width (sweep 512-2048 for large C; keep C//tn even on v7x).
    """
    B, D = embeddings.shape
    C, D2 = weight.shape
    assert D == D2, "in_features mismatch"

    # Pick a class tile: a multiple of 128 that divides C, no larger than `tn`.
    tn = min(tn, C)
    tn -= tn % 128
    while tn > 128 and C % tn != 0:
        tn -= 128
    assert tn >= 128 and C % tn == 0 and tn % 128 == 0, \
        "out_features must be a multiple of 128"
    # TODO(synk): add tail-tile masking to support C not a multiple of 128.

    # Inverse norms hoisted out of the grid (F.normalize eps=1e-12 equivalent).
    emb_f32 = embeddings.astype(jnp.float32)
    inv_row = jax.lax.rsqrt(
        jnp.maximum(jnp.sum(emb_f32 * emb_f32, axis=1, keepdims=True), 1e-24))  # (B, 1)
    inv_col = jax.lax.rsqrt(
        jnp.maximum(jnp.sum(jnp.square(weight.astype(jnp.float32)), axis=1),
                    1e-24)).reshape(1, C)                                        # (1, C)

    labels_2d = labels.reshape(B, 1).astype(jnp.int32)

    cos_m = math.cos(m2)
    sin_m = math.sin(m2)
    th = math.cos(math.pi - m2)
    mm = math.sin(math.pi - m2) * m2

    kern = functools.partial(
        combined_kernel, s=s, cos_m=cos_m, sin_m=sin_m, th=th, mm=mm, m3=m3,
        easy_margin=easy_margin)

    w_bytes = jnp.dtype(weight.dtype).itemsize
    emb_bytes = jnp.dtype(embeddings.dtype).itemsize
    o_bytes = jnp.dtype(out_dtype).itemsize

    # VMEM budget: double-buffered weight tile + double-buffered output tile
    # + small resident blocks (embeddings, norms, labels), with headroom.
    vmem_needed = (2 * tn * D * w_bytes
                   + 2 * B * tn * o_bytes
                   + 2 * (B * D * emb_bytes + B * 8 + tn * 8))
    vmem_limit = min(max(int(vmem_needed * 1.5) + (4 << 20), 16 << 20), 100 << 20)

    cost = pl.CostEstimate(
        flops=2 * B * D * C + 12 * B * C,
        transcendentals=B * C,
        bytes_accessed=(w_bytes * D * C + emb_bytes * B * D
                        + o_bytes * B * C + 4 * (B + C) + 4 * B),
    )

    return pl.pallas_call(
        kern,
        out_shape=jax.ShapeDtypeStruct((B, C), out_dtype),
        grid=(C // tn,),
        in_specs=[
            pl.BlockSpec((B, D), lambda j: (0, 0)),      # embeddings: whole block
            pl.BlockSpec((tn, D), lambda j: (j, 0)),     # weight: class tile (no transpose)
            pl.BlockSpec((B, 1), lambda j: (0, 0)),      # inv_row: constant block
            pl.BlockSpec((1, tn), lambda j: (0, j)),     # inv_col: class tile
            pl.BlockSpec((B, 1), lambda j: (0, 0)),      # labels: constant block
        ],
        out_specs=pl.BlockSpec((B, tn), lambda j: (0, j)),
        compiler_params=pltpu.CompilerParams(
            dimension_semantics=("parallel",),           # split classes across TCs (v7x)
            vmem_limit_bytes=vmem_limit),
        cost_estimate=cost,
    )(embeddings, weight, inv_row, inv_col, labels_2d)


def combined_reference(embeddings, weight, labels, *,
                       s=64.0, m2=0.3, m3=0.2, easy_margin=False):
    # Pure-JAX mirror of the PyTorch forward.
    xn = embeddings / jnp.maximum(
        jnp.linalg.norm(embeddings, axis=1, keepdims=True), 1e-12)
    wn = weight / jnp.maximum(
        jnp.linalg.norm(weight, axis=1, keepdims=True), 1e-12)
    cosine = xn @ wn.T
    sine = jnp.sqrt(jnp.maximum(1.0 - cosine * cosine, 0.0))
    cos_m, sin_m = math.cos(m2), math.sin(m2)
    th = math.cos(math.pi - m2)
    mm = math.sin(math.pi - m2) * m2
    phi = cosine * cos_m - sine * sin_m - m3
    if easy_margin:
        phi = jnp.where(cosine > 0.0, phi, cosine)
    else:
        phi = jnp.where(cosine > th, phi, cosine - mm)
    onehot = jax.nn.one_hot(labels, weight.shape[0], dtype=bool)
    return jnp.where(onehot, phi, cosine) * s


if __name__ == "__main__":
    # Small shapes consistent with the module: batch=8, in_features=32,
    # out_features=256 (tn=128 -> two class tiles, exercises the grid).
    B, D, C = 8, 32, 256
    key = jax.random.PRNGKey(0)
    k_emb, k_w, k_lbl = jax.random.split(key, 3)

    embeddings = jax.random.normal(k_emb, (B, D), dtype=jnp.float32)

    # Deterministic xavier_uniform-like init for the (out_features, in_features) weight.
    bound = math.sqrt(6.0 / (C + D))
    weight = jax.random.uniform(k_w, (C, D), dtype=jnp.float32,
                                minval=-bound, maxval=bound)

    labels = jax.random.randint(k_lbl, (B,), 0, C, dtype=jnp.int32)

    out = combined_forward(embeddings, weight, labels,
                           s=64.0, m2=0.3, m3=0.2, easy_margin=False, tn=128)
    out = jax.block_until_ready(out)

    ref = combined_reference(embeddings, weight, labels,
                             s=64.0, m2=0.3, m3=0.2, easy_margin=False)
    assert out.shape == (B, C)
    assert jnp.allclose(out, ref, atol=1e-4, rtol=1e-4), "mismatch vs reference"

    print("KERNEL_OK")
</pallas_src>

<mosaic_0001>
module attributes {stable_mosaic.version = 11 : i64} {
  func.func @combined_kernel(%arg0: i32, %arg1: memref<8x32xf32, #tpu.memory_space<vmem>>, %arg2: memref<128x32xf32, #tpu.memory_space<vmem>>, %arg3: memref<8x1xf32, #tpu.memory_space<vmem>>, %arg4: memref<1x128xf32, #tpu.memory_space<vmem>>, %arg5: memref<8x1xi32, #tpu.memory_space<vmem>>, %arg6: memref<8x128xf32, #tpu.memory_space<vmem>>) attributes {dimension_semantics = [#tpu.dimension_semantics<parallel>], iteration_bounds = array<i64: 2>, scalar_prefetch = 0 : i64, scratch_operands = 0 : i64, tpu.core_type = #tpu.core_type<tc>, window_params = [{pipeline_mode = #tpu.pipeline_mode<synchronous>, transform_indices = @transform_0, window_bounds = array<i64: 8, 32>}, {transform_indices = @transform_1, window_bounds = array<i64: 128, 32>}, {pipeline_mode = #tpu.pipeline_mode<synchronous>, transform_indices = @transform_2, window_bounds = array<i64: 8, 1>}, {transform_indices = @transform_3, window_bounds = array<i64: 1, 128>}, {pipeline_mode = #tpu.pipeline_mode<synchronous>, transform_indices = @transform_4, window_bounds = array<i64: 8, 1>}, {transform_indices = @transform_5, window_bounds = array<i64: 8, 128>}]} {
    %c0 = arith.constant 0 : index
    %c0_0 = arith.constant 0 : index
    %0 = vector.load %arg1[%c0, %c0_0] : memref<8x32xf32, #tpu.memory_space<vmem>>, vector<8x32xf32>
    %c0_1 = arith.constant 0 : index
    %c0_2 = arith.constant 0 : index
    %1 = vector.load %arg2[%c0_1, %c0_2] : memref<128x32xf32, #tpu.memory_space<vmem>>, vector<128x32xf32>
    %cst = arith.constant dense<0.000000e+00> : vector<8x128xf32>
    %2 = tpu.matmul %0, %1, %cst {dimension_numbers = #tpu.dot_dimension_numbers<[1], [1], [0], [0], [0, 0, 1, 0], [], []>} : vector<8x32xf32>, vector<128x32xf32>, vector<8x128xf32> -> vector<8x128xf32>
    %c0_3 = arith.constant 0 : index
    %c0_4 = arith.constant 0 : index
    %3 = vector.load %arg3[%c0_3, %c0_4] : memref<8x1xf32, #tpu.memory_space<vmem>>, vector<8x1xf32>
    %4 = vector.broadcast %3 : vector<8x1xf32> to vector<8x128xf32>
    %5 = arith.mulf %2, %4 : vector<8x128xf32>
    %c0_5 = arith.constant 0 : index
    %c0_6 = arith.constant 0 : index
    %6 = vector.load %arg4[%c0_5, %c0_6] : memref<1x128xf32, #tpu.memory_space<vmem>>, vector<1x128xf32>
    %7 = vector.broadcast %6 : vector<1x128xf32> to vector<8x128xf32>
    %8 = arith.mulf %5, %7 : vector<8x128xf32>
    %9 = arith.mulf %8, %8 : vector<8x128xf32>
    %cst_7 = arith.constant 1.000000e+00 : f32
    %10 = vector.broadcast %cst_7 : f32 to vector<8x128xf32>
    %11 = arith.subf %10, %9 : vector<8x128xf32>
    %cst_8 = arith.constant 0.000000e+00 : f32
    %12 = vector.broadcast %cst_8 : f32 to vector<8x128xf32>
    %13 = arith.maximumf %11, %12 : vector<8x128xf32>
    %14 = math.sqrt %13 : vector<8x128xf32>
    %cst_9 = arith.constant 0.955336511 : f32
    %15 = vector.broadcast %cst_9 : f32 to vector<8x128xf32>
    %16 = arith.mulf %8, %15 : vector<8x128xf32>
    %cst_10 = arith.constant 0.295520216 : f32
    %17 = vector.broadcast %cst_10 : f32 to vector<8x128xf32>
    %18 = arith.mulf %14, %17 : vector<8x128xf32>
    %19 = arith.subf %16, %18 : vector<8x128xf32>
    %cst_11 = arith.constant 2.000000e-01 : f32
    %20 = vector.broadcast %cst_11 : f32 to vector<8x128xf32>
    %21 = arith.subf %19, %20 : vector<8x128xf32>
    %cst_12 = arith.constant -0.955336511 : f32
    %22 = vector.broadcast %cst_12 : f32 to vector<8x128xf32>
    %23 = arith.cmpf ogt, %8, %22 : vector<8x128xf32>
    %cst_13 = arith.constant 0.0886560603 : f32
    %24 = vector.broadcast %cst_13 : f32 to vector<8x128xf32>
    %25 = arith.subf %8, %24 : vector<8x128xf32>
    %26 = arith.select %23, %21, %25 : vector<8x128xi1>, vector<8x128xf32>
    %27 = tpu.iota {dimensions = array<i32: 1>} : vector<8x128xi32>
    %c128_i32 = arith.constant 128 : i32
    %28 = arith.muli %arg0, %c128_i32 : i32
    %29 = vector.broadcast %28 : i32 to vector<8x128xi32>
    %30 = arith.addi %27, %29 : vector<8x128xi32>
    %c0_14 = arith.constant 0 : index
    %c0_15 = arith.constant 0 : index
    %31 = vector.load %arg5[%c0_14, %c0_15] : memref<8x1xi32, #tpu.memory_space<vmem>>, vector<8x1xi32>
    %32 = vector.broadcast %31 : vector<8x1xi32> to vector<8x128xi32>
    %33 = arith.cmpi eq, %30, %32 : vector<8x128xi32>
    %34 = arith.select %33, %26, %8 : vector<8x128xi1>, vector<8x128xf32>
    %cst_16 = arith.constant 6.400000e+01 : f32
    %35 = vector.broadcast %cst_16 : f32 to vector<8x128xf32>
    %36 = arith.mulf %34, %35 : vector<8x128xf32>
    %c0_17 = arith.constant 0 : index
    %c0_18 = arith.constant 0 : index
    %37 = vector.load %arg6[%c0_17, %c0_18] : memref<8x128xf32, #tpu.memory_space<vmem>>, vector<8x128xf32>
    tpu.vector_store %arg6[%c0_17, %c0_18], %36 {strides = array<i32>} : memref<8x128xf32, #tpu.memory_space<vmem>>, vector<8x128xf32>,
    return
  }
  func.func @transform_0(%arg0: i32) -> (i32, i32) {
    %c0_i32 = arith.constant 0 : i32
    %c0_i32_0 = arith.constant 0 : i32
    %c0_i32_1 = arith.constant 0 : i32
    return %c0_i32, %c0_i32_0 : i32, i32
  }
  func.func @transform_1(%arg0: i32) -> (i32, i32) {
    %c0_i32 = arith.constant 0 : i32
    %c0_i32_0 = arith.constant 0 : i32
    return %arg0, %c0_i32 : i32, i32
  }
  func.func @transform_2(%arg0: i32) -> (i32, i32) {
    %c0_i32 = arith.constant 0 : i32
    %c0_i32_0 = arith.constant 0 : i32
    %c0_i32_1 = arith.constant 0 : i32
    return %c0_i32, %c0_i32_0 : i32, i32
  }
  func.func @transform_3(%arg0: i32) -> (i32, i32) {
    %c0_i32 = arith.constant 0 : i32
    %c0_i32_0 = arith.constant 0 : i32
    return %c0_i32, %arg0 : i32, i32
  }
  func.func @transform_4(%arg0: i32) -> (i32, i32) {
    %c0_i32 = arith.constant 0 : i32
    %c0_i32_0 = arith.constant 0 : i32
    %c0_i32_1 = arith.constant 0 : i32
    return %c0_i32, %c0_i32_0 : i32, i32
  }
  func.func @transform_5(%arg0: i32) -> (i32, i32) {
    %c0_i32 = arith.constant 0 : i32
    %c0_i32_0 = arith.constant 0 : i32
    return %c0_i32, %arg0 : i32, i32
  }
}

</mosaic_0001>

<llo_original>
// kernel: tpu_custom_call.1
$region0: #{tpu_custom_call.1}
  #allocation0 [shape = 'u32[]', space=smem, size = 0x4, offset = 0x4, fixed_abs, tag = 'smem constant byte address 0x4 - core index']
  #allocation1 [shape = 'u32[72,128]{1,0:T(1,128)}', space=vmem, size = 0x9000, scoped, tag = 'internal scratch']
  %s0 = inlined_call_operand.vmem [shape: f32[8,32], index: 0, kind: input, shape index: {}]
  %s1 = inlined_call_operand.vmem [shape: f32[256,32], index: 1, kind: input, shape index: {}]
  %s2 = inlined_call_operand.vmem [shape: f32[8,1], index: 2, kind: input, shape index: {}]
  %s3 = inlined_call_operand.vmem [shape: f32[1,256], index: 3, kind: input, shape index: {}]
  %s4 = inlined_call_operand.vmem [shape: s32[8,1], index: 4, kind: input, shape index: {}]
  %s5 = inlined_call_operand.hbm [shape: f32[8,256], index: 5, kind: output, shape index: {}]
  %s6 = sld [smem:[#allocation0]]
  $region53: #{tpu_custom_call.1} parent=0
    _
  %s8 = ssub.s32 1, %s6
  %s9 = scalar_select 0, %s8, %s6
  $region1: #{tpu_custom_call.1} parent=0
    #allocation2 [shape = 'u8[8192]{0}', space=vmem, size = 0x2000, scoped, tag = 'output window, operand 0']
    #allocation3 [shape = 's32[2]{0}', space=sflag, size = 0x8, scoped, tag = 'scoped memory for tpu_custom_call.1']
    %10 = vsyncpa [#allocation3], 0
    %s11 = scalar_lea.sflag [#allocation3], 1
    %12 = vsyncpa %s11, 0
    loop: start=0, step=1, limit=4
    $region2: #{tpu_custom_call.1} parent=1 // loop_pre_header
      _
    $region3: #{tpu_custom_call.1} parent=1 // loop_header
      %s14 = sphi 0, %s18
      %p15 = scmp.ge.s32.totalorder %s14, 4
      %s22 = sphi 0, %s22
      %s24 = sphi 0, %s22
      %s25 = sphi 0, %s24
      %s39 = sphi 0, %s25
      %s45 = sphi 0, %s47
      %s48 = sphi 0, %s45
      %s49 = sphi 0, %s48
      %s65 = sphi 0, %s49
      %s69 = sphi 0, %s69
      %s71 = sphi 0, %s69
      %s72 = sphi 0, %s71
      %s86 = sphi 0, %s72
      %s92 = sphi 0, %s94
      %s95 = sphi 0, %s92
      %s96 = sphi 0, %s95
      %s112 = sphi 0, %s96
      %s116 = sphi 0, %s116
      %s118 = sphi 0, %s116
      %s119 = sphi 0, %s118
      %s133 = sphi 0, %s119
      %s139 = sphi 0, %s141
      %s142 = sphi 0, %s139
      %s143 = sphi 0, %s142
      %s159 = sphi 0, %s143
    $region4: #{tpu_custom_call.1} parent=1 // loop_header_branch
      %17 = sbr.rel (%p15) target = $region8
    $region5: #{tpu_custom_call.1} parent=1 // loop_body
      %s19 = ssub.s32 %s14, 1
      %s20 = ssub.s32 %s14, 2
      %s21 = sadd.s32 %s14, 1
      %s23 = sadd.s32 %s22, 1
      %p26 = scmp.eq.s32.totalorder %s14, 1
      %p27 = scmp.ne.s32.totalorder %s22, %s24
      %p28 = scmp.eq.s32.totalorder %s14, 0
      %p29 = por %p27, %p28
      %p30 = scmp.ne.s32.totalorder %s22, %s24
      %p31 = scmp.eq.s32.totalorder %s19, 1
      %p32 = por %p30, %p31
      %p33 = scmp.ne.s32.totalorder %s24, %s25
      %p34 = scmp.eq.s32.totalorder %s19, 0
      %p35 = por %p33, %p34
      %p36 = scmp.ne.s32.totalorder %s24, %s25
      %p37 = scmp.eq.s32.totalorder %s20, 1
      %p38 = por %p36, %p37
      %p40 = scmp.ne.s32.totalorder %s25, %s39
      %p41 = scmp.eq.s32.totalorder %s20, 0
      %p42 = por %p40, %p41
      %s43 = ssub.s32 %s14, %s21
      %p44 = scmp.eq.s32.totalorder %s43, 0
      %s46 = sadd.s32 %s45, 1
      %s47 = scalar_select %p44, %s45, %s46
      %p50 = pneg %p44
      %p51 = scmp.eq.s32.totalorder %s14, 1
      %p52 = por %p50, %p51
      %p53 = scmp.ne.s32.totalorder %s45, %s48
      %p54 = scmp.eq.s32.totalorder %s14, 0
      %p55 = por %p53, %p54
      %p56 = scmp.ne.s32.totalorder %s45, %s48
      %p57 = scmp.eq.s32.totalorder %s19, 1
      %p58 = por %p56, %p57
      %p59 = scmp.ne.s32.totalorder %s48, %s49
      %p60 = scmp.eq.s32.totalorder %s19, 0
      %p61 = por %p59, %p60
      %p62 = scmp.ne.s32.totalorder %s48, %s49
      %p63 = scmp.eq.s32.totalorder %s20, 1
      %p64 = por %p62, %p63
      %p66 = scmp.ne.s32.totalorder %s49, %s65
      %p67 = scmp.eq.s32.totalorder %s20, 0
      %p68 = por %p66, %p67
      %s70 = sadd.s32 %s69, 1
      %p73 = scmp.eq.s32.totalorder %s14, 1
      %p74 = scmp.ne.s32.totalorder %s69, %s71
      %p75 = scmp.eq.s32.totalorder %s14, 0
      %p76 = por %p74, %p75
      %p77 = scmp.ne.s32.totalorder %s69, %s71
      %p78 = scmp.eq.s32.totalorder %s19, 1
      %p79 = por %p77, %p78
      %p80 = scmp.ne.s32.totalorder %s71, %s72
      %p81 = scmp.eq.s32.totalorder %s19, 0
      %p82 = por %p80, %p81
      %p83 = scmp.ne.s32.totalorder %s71, %s72
      %p84 = scmp.eq.s32.totalorder %s20, 1
      %p85 = por %p83, %p84
      %p87 = scmp.ne.s32.totalorder %s72, %s86
      %p88 = scmp.eq.s32.totalorder %s20, 0
      %p89 = por %p87, %p88
      %s90 = ssub.s32 %s14, %s21
      %p91 = scmp.eq.s32.totalorder %s90, 0
      %s93 = sadd.s32 %s92, 1
      %s94 = scalar_select %p91, %s92, %s93
      %p97 = pneg %p91
      %p98 = scmp.eq.s32.totalorder %s14, 1
      %p99 = por %p97, %p98
      %p100 = scmp.ne.s32.totalorder %s92, %s95
      %p101 = scmp.eq.s32.totalorder %s14, 0
      %p102 = por %p100, %p101
      %p103 = scmp.ne.s32.totalorder %s92, %s95
      %p104 = scmp.eq.s32.totalorder %s19, 1
      %p105 = por %p103, %p104
      %p106 = scmp.ne.s32.totalorder %s95, %s96
      %p107 = scmp.eq.s32.totalorder %s19, 0
      %p108 = por %p106, %p107
      %p109 = scmp.ne.s32.totalorder %s95, %s96
      %p110 = scmp.eq.s32.totalorder %s20, 1
      %p111 = por %p109, %p110
      %p113 = scmp.ne.s32.totalorder %s96, %s112
      %p114 = scmp.eq.s32.totalorder %s20, 0
      %p115 = por %p113, %p114
      %s117 = sadd.s32 %s116, 1
      %p120 = scmp.eq.s32.totalorder %s14, 1
      %p121 = scmp.ne.s32.totalorder %s116, %s118
      %p122 = scmp.eq.s32.totalorder %s14, 0
      %p123 = por %p121, %p122
      %p124 = scmp.ne.s32.totalorder %s116, %s118
      %p125 = scmp.eq.s32.totalorder %s19, 1
      %p126 = por %p124, %p125
      %p127 = scmp.ne.s32.totalorder %s118, %s119
      %p128 = scmp.eq.s32.totalorder %s19, 0
      %p129 = por %p127, %p128
      %p130 = scmp.ne.s32.totalorder %s118, %s119
      %p131 = scmp.eq.s32.totalorder %s20, 1
      %p132 = por %p130, %p131
      %p134 = scmp.ne.s32.totalorder %s119, %s133
      %p135 = scmp.eq.s32.totalorder %s20, 0
      %p136 = por %p134, %p135
      %s137 = ssub.s32 %s14, %s21
      %p138 = scmp.eq.s32.totalorder %s137, 0
      %s140 = sadd.s32 %s139, 1
      %s141 = scalar_select %p138, %s139, %s140
      %p144 = pneg %p138
      %p145 = scmp.eq.s32.totalorder %s14, 1
      %p146 = por %p144, %p145
      %p147 = scmp.ne.s32.totalorder %s139, %s142
      %p148 = scmp.eq.s32.totalorder %s14, 0
      %p149 = por %p147, %p148
      %p150 = scmp.ne.s32.totalorder %s139, %s142
      %p151 = scmp.eq.s32.totalorder %s19, 1
      %p152 = por %p150, %p151
      %p153 = scmp.ne.s32.totalorder %s142, %s143
      %p154 = scmp.eq.s32.totalorder %s19, 0
      %p155 = por %p153, %p154
      %p156 = scmp.ne.s32.totalorder %s142, %s143
      %p157 = scmp.eq.s32.totalorder %s20, 1
      %p158 = por %p156, %p157
      %p160 = scmp.ne.s32.totalorder %s143, %s159
      %p161 = scmp.eq.s32.totalorder %s20, 0
      %p162 = por %p160, %p161
      %p163 = scmp.le.s32.totalorder 1, %s14
      %p164 = scmp.lt.s32.totalorder %s14, 3
      %p165 = pnand %p163, %p164
      %p166 = pneg %p165
      // Predicated region
      $region9: #{tpu_custom_call.1} parent=5 // pred_check
        _
      $region10: #{tpu_custom_call.1} parent=5 // pred_check_branch
        %168 = sbr.rel (%p165) target = $region12
      $region11: #{tpu_custom_call.1} parent=5 // pred_region
        %s169 = ssub.s32 %s14, 1
        // Predicated region
        $region13: #{tpu_custom_call.1} parent=11 // pred_check
          %p170 = pneg %p35
        $region14: #{tpu_custom_call.1} parent=11 // pred_check_branch
          %172 = sbr.rel (%p170) target = $region16
        $region15: #{tpu_custom_call.1} parent=11 // pred_region
          _
        $region16: #{tpu_custom_call.1} parent=11 // pred_fallthru
          _
        // Predicated region
        $region17: #{tpu_custom_call.1} parent=11 // pred_check
          %p173 = pneg %p82
        $region18: #{tpu_custom_call.1} parent=11 // pred_check_branch
          %175 = sbr.rel (%p173) target = $region20
        $region19: #{tpu_custom_call.1} parent=11 // pred_region
          _
        $region20: #{tpu_custom_call.1} parent=11 // pred_fallthru
          _
        // Predicated region
        $region21: #{tpu_custom_call.1} parent=11 // pred_check
          %p176 = pneg %p129
        $region22: #{tpu_custom_call.1} parent=11 // pred_check_branch
          %178 = sbr.rel (%p176) target = $region24
        $region23: #{tpu_custom_call.1} parent=11 // pred_region
          _
        $region24: #{tpu_custom_call.1} parent=11 // pred_fallthru
          _
      $region12: #{tpu_custom_call.1} parent=5 // pred_fallthru
        _
      %p179 = scmp.lt.s32.totalorder %s14, 2
      // Predicated region
      $region25: #{tpu_custom_call.1} parent=5 // pred_check
        %p180 = pneg %p179
      $region26: #{tpu_custom_call.1} parent=5 // pred_check_branch
        %182 = sbr.rel (%p180) target = $region28
      $region27: #{tpu_custom_call.1} parent=5 // pred_region
        // Predicated region
        $region29: #{tpu_custom_call.1} parent=27 // pred_check
          %p183 = pneg %p55
        $region30: #{tpu_custom_call.1} parent=27 // pred_check_branch
          %185 = sbr.rel (%p183) target = $region32
        $region31: #{tpu_custom_call.1} parent=27 // pred_region
          %s186 = smul.u32 16, %s14
          %p187 = scmp.lt.s32.totalorder %s186, 31
          %s188 = scalar_select %p187, %s186, 31
          %s189 = smul.addr %s188, 8
          %s190 = scalar_lea.vmem %s1, %s189
          %s191 = smul.u32 16, %s14
        $region32: #{tpu_custom_call.1} parent=27 // pred_fallthru
          _
        // Predicated region
        $region33: #{tpu_custom_call.1} parent=27 // pred_check
          %p192 = pneg %p102
        $region34: #{tpu_custom_call.1} parent=27 // pred_check_branch
          %194 = sbr.rel (%p192) target = $region36
        $region35: #{tpu_custom_call.1} parent=27 // pred_region
          %p195 = scmp.lt.s32.totalorder %s14, 1
          %s196 = scalar_select %p195, %s14, 1
          %s197 = scalar_lea.vmem %s3, %s196
        $region36: #{tpu_custom_call.1} parent=27 // pred_fallthru
          _
      $region28: #{tpu_custom_call.1} parent=5 // pred_fallthru
        _
      %p198 = scmp.le.s32.totalorder 1, %s14
      %p199 = scmp.lt.s32.totalorder %s14, 3
      %p200 = pnand %p198, %p199
      %p201 = pneg %p200
      // Predicated region
      $region37: #{tpu_custom_call.1} parent=5 // pred_check
        _
      $region38: #{tpu_custom_call.1} parent=5 // pred_check_branch
        %203 = sbr.rel (%p200) target = $region40
      $region39: #{tpu_custom_call.1} parent=5 // pred_region
        %s204 = ssub.s32 %s14, 1
        %p205 = pneg %p35
        %p206 = pneg %p32
        %s207 = smul.u32 16, %s19
        %p208 = scmp.lt.s32.totalorder %s207, 31
        %s209 = scalar_select %p208, %s207, 31
        %s210 = smul.addr %s209, 8
        %s211 = scalar_lea.vmem %s1, %s210
        %p212 = pneg %p61
        %p213 = pneg %p58
        %p214 = pneg %p82
        %p215 = pneg %p79
        %p216 = scmp.lt.s32.totalorder %s19, 1
        %s217 = scalar_select %p216, %s19, 1
        %s218 = scalar_lea.vmem %s3, %s217
        %p219 = pneg %p108
        %p220 = pneg %p105
        %p221 = pneg %p129
        %p222 = pneg %p126
        %p223 = pneg %p155
        %p224 = pneg %p152
        %s225 = sand.u32 %s142, 1
        %s226 = scalar_lea.sflag [#allocation3], %s225
        %s227 = sand.u32 %s142, 1
        %s228 = smul.addr %s227, 8
        %s229 = scalar_lea.vmem [#allocation2], %s228
        %s230 = smul.u32 16, %s19
        %p231 = scmp.lt.s32.totalorder %s230, 31
        %s232 = scalar_select %p231, %s230, 31
        %s233 = smul.addr %s232, 8
        %s234 = scalar_lea.vmem %s1, %s233
        %s235 = smul.u32 16, %s19
        %p236 = scmp.lt.s32.totalorder %s19, 1
        %s237 = scalar_select %p236, %s19, 1
        %s238 = scalar_lea.vmem %s3, %s237
        %v239 = vld [vmem:[%s0] sm:$0xff]
        %v240 = vld [vmem:[%s234] sm:$0xff]
        %v241 = vld [vmem:[%s234 + $0x8] sm:$0xff]
        %v242 = vld [vmem:[%s234 + $0x10] sm:$0xff]
        %v243 = vld [vmem:[%s234 + $0x18] sm:$0xff]
        %v244 = vld [vmem:[%s234 + $0x20] sm:$0xff]
        %v245 = vld [vmem:[%s234 + $0x28] sm:$0xff]
        %v246 = vld [vmem:[%s234 + $0x30] sm:$0xff]
        %v247 = vld [vmem:[%s234 + $0x38] sm:$0xff]
        %v248 = vld [vmem:[%s234 + $0x40] sm:$0xff]
        %v249 = vld [vmem:[%s234 + $0x48] sm:$0xff]
        %v250 = vld [vmem:[%s234 + $0x50] sm:$0xff]
        %v251 = vld [vmem:[%s234 + $0x58] sm:$0xff]
        %v252 = vld [vmem:[%s234 + $0x60] sm:$0xff]
        %v253 = vld [vmem:[%s234 + $0x68] sm:$0xff]
        %v254 = vld [vmem:[%s234 + $0x70] sm:$0xff]
        %v255 = vld [vmem:[%s234 + $0x78] sm:$0xff]
        %vm256 = vcmask 261120
        %v258 = vsel %vm256, %v239, 0
        %v261 = vsel %vm256, %v240, 0
        %v264 = vsel %vm256, %v241, 0
        %v267 = vsel %vm256, %v242, 0
        %v270 = vsel %vm256, %v243, 0
        %v273 = vsel %vm256, %v244, 0
        %v276 = vsel %vm256, %v245, 0
        %v279 = vsel %vm256, %v246, 0
        %v282 = vsel %vm256, %v247, 0
        %v285 = vsel %vm256, %v248, 0
        %v288 = vsel %vm256, %v249, 0
        %v291 = vsel %vm256, %v250, 0
        %v294 = vsel %vm256, %v251, 0
        %v297 = vsel %vm256, %v252, 0
        %v300 = vsel %vm256, %v253, 0
        %v303 = vsel %vm256, %v254, 0
        %v306 = vsel %vm256, %v255, 0
        %308 = vmatpush.xpose.msra.mxu0 %v306
        %309 = vmatpush.xpose.msra.mxu0 %v303
        %310 = vmatpush.xpose.msra.mxu0 %v300
        %311 = vmatpush.xpose.msra.mxu0 %v297
        %312 = vmatpush.xpose.msra.mxu0 %v294
        %313 = vmatpush.xpose.msra.mxu0 %v291
        %314 = vmatpush.xpose.msra.mxu0 %v288
        %315 = vmatpush.xpose.msra.mxu0 %v285
        %316 = vmatpush.xpose.msra.mxu0 %v282
        %317 = vmatpush.xpose.msra.mxu0 %v279
        %318 = vmatpush.xpose.msra.mxu0 %v276
        %319 = vmatpush.xpose.msra.mxu0 %v273
        %320 = vmatpush.xpose.msra.mxu0 %v270
        %321 = vmatpush.xpose.msra.mxu0 %v267
        %322 = vmatpush.xpose.msra.mxu0 %v264
        %323 = vmatpush.xpose.msra.mxu0 %v261
        %324 = vmatmul.f32.gmra.mxu0 %v258
        %v325 = vpop.f32.mrf.mxu0
        %v326 = vadd.f32 0.0, %v325
        %327 = vdwg.mxu0
        %v328 = vld [vmem:[%s2] sm:$0xff]
        %330 = vset.pattern.permute.xlu0 0
        %331 = vperm.xlu0 %330, %v328
        %v332 = vpop.permute.xlu0 %331
        %v334 = vmul.f32 %v326, %v332
        %v335 = vld [vmem:[%s238] sm:$0x1]
        %v337 = vperm.slane %v335, 0
        %v339 = vmul.f32 %v334, %v337
        %v340 = vmul.f32 %v339, %v339
        %v341 = vsub.f32 1.0, %v340
        %v342 = vmax.f32 %v341, 0.0
        %v343 = vrsqrt.pop %v342
        %v344 = vmul.f32 %v343, %v342
        %v345 = vmul.f32 %v344, %v343
        %v346 = vmul.f32 0.5, %v345
        %v347 = vsub.f32 1.5, %v346
        %v348 = vmul.f32 %v343, %v347
        %v349 = vmul.f32 %v342, %v348
        %vm350 = vcmp.eq.f32.partialorder %v342, inf
        %v351 = vsel %vm350, %v342, %v349
        %vm352 = vcmp.eq.f32.partialorder %v342, 0.0
        %v353 = vand.u32 %v342, 2147483648
        %v354 = vsel %vm352, %v353, %v351
        %v355 = vmul.f32 %v339, 0.9553365
        %v356 = vmul.f32 %v354, 0.29552022
        %v357 = vsub.f32 %v355, %v356
        %v358 = vsub.f32 %v357, 0.2
        %vm359 = vcmp.gt.f32.partialorder %v339, -0.9553365
        %v360 = vsub.f32 %v339, 0.08865606
        %v361 = vsel %vm359, %v358, %v360
        %v362 = vlaneseq
        %v363 = vand.u32 %v362, 127
        %s364 = smul.u32 %s19, 128
        %v365 = vstv %s364
        %v366 = vadd.s32 %v363, %v365
        %v367 = vld [vmem:[%s4] sm:$0xff]
        %368 = vset.pattern.permute.xlu0 0
        %369 = vperm.xlu0 %368, %v367
        %v370 = vpop.permute.xlu0 %369
        %vm371 = vcmp.eq.s32.totalorder %v366, %v370
        %v372 = vsel %vm371, %v361, %v339
        %v373 = vmul.f32 %v372, 64.0
        %374 = vst [vmem:[%s229] sm:$0xff] %v373
        %s375 = sand.u32 %s142, 1
        %s376 = scalar_lea.sflag [#allocation3], %s375
        %s377 = sand.u32 %s142, 1
        %s378 = smul.addr %s377, 8
        %s379 = scalar_lea.vmem [#allocation2], %s378
        // Predicated region
        $region41: #{tpu_custom_call.1} parent=39 // pred_check
          %p380 = pneg %p152
        $region42: #{tpu_custom_call.1} parent=39 // pred_check_branch
          %382 = sbr.rel (%p380) target = $region44
        $region43: #{tpu_custom_call.1} parent=39 // pred_region
          %384 = vsyncadd %s376, 0
          %s385 = smul.addr %s19, 8
          %s386 = scalar_lea.hbm %s5, %s385
          %s388 = sshll.u32 %s379, 4
          %s389 = int_to_ptr.vmem [resolvable:$true] %s388
          %s390 = sshll.u32 %s386, 4
          %s391 = int_to_ptr.hbm [resolvable:$true] %s390
          %393 = dma.vmem_to_hbm [thread:$0]  %s389, 128, %s391, %s376
        $region44: #{tpu_custom_call.1} parent=39 // pred_fallthru
          _
      $region40: #{tpu_custom_call.1} parent=5 // pred_fallthru
        _
      %p394 = scmp.le.s32.totalorder 2, %s14
      // Predicated region
      $region45: #{tpu_custom_call.1} parent=5 // pred_check
        %p395 = pneg %p394
      $region46: #{tpu_custom_call.1} parent=5 // pred_check_branch
        %397 = sbr.rel (%p395) target = $region48
      $region47: #{tpu_custom_call.1} parent=5 // pred_region
        %s398 = ssub.s32 %s14, 2
        // Predicated region
        $region49: #{tpu_custom_call.1} parent=47 // pred_check
          %p399 = pneg %p158
        $region50: #{tpu_custom_call.1} parent=47 // pred_check_branch
          %401 = sbr.rel (%p399) target = $region52
        $region51: #{tpu_custom_call.1} parent=47 // pred_region
          %s402 = sand.u32 %s143, 1
          %s403 = scalar_lea.sflag [#allocation3], %s402
          %s404 = sand.u32 %s143, 1
          %s405 = smul.addr %s404, 8
          %s406 = scalar_lea.vmem [#allocation2], %s405
          %408 = dma.done %s403, 128
        $region52: #{tpu_custom_call.1} parent=47 // pred_fallthru
          _
      $region48: #{tpu_custom_call.1} parent=5 // pred_fallthru
        _
    $region6: #{tpu_custom_call.1} parent=1 // loop_footer
      %s18 = sadd.s32 1, %s14
    $region7: #{tpu_custom_call.1} parent=1 // loop_footer_branch
      %13 = sbr.rel target = $region3
    $region8: #{tpu_custom_call.1} parent=1 // loop_exit
      _
    %409 = vsyncpa [#allocation3], 1
    %s410 = scalar_lea.sflag [#allocation3], 1
    %411 = vsyncpa %s410, 1

</llo_original>
